<compile_context>
chip_gen: v7x
topology: tpu7x:2x2x1
jax: 0.10.0
libtpu: 0.0.40
codegen_flags: <defaults>
</compile_context>

<pallas_src>
import math

import jax
import jax.numpy as jnp
from jax.experimental import pallas as pl
from jax.experimental.pallas import tpu as pltpu

# Shapes implied by the module.
D_MODEL = 32          # d_model
MAX_LEN = 16          # vocab_size is (ab)used as the PE-table length in __init__
BATCH   = 2
SEQ     = 8           # x.size(1) <= MAX_LEN
LANES   = 128


def make_pe_table(max_len: int, d_model: int) -> jnp.ndarray:
    """Sinusoidal table, identical to the module's __init__ buffer (max_len, d_model)."""
    position = jnp.arange(max_len, dtype=jnp.float32)[:, None]
    div_term = jnp.exp(
        jnp.arange(0, d_model, 2, dtype=jnp.float32) * (-math.log(10000.0) / d_model)
    )
    pe = jnp.zeros((max_len, d_model), jnp.float32)
    pe = pe.at[:, 0::2].set(jnp.sin(position * div_term))
    pe = pe.at[:, 1::2].set(jnp.cos(position * div_term))
    return pe


def pe_add_kernel(x_ref, pe_ref, o_ref):
    # Same-shape, full-vreg add: vld / vadd / vst only.
    o_ref[...] = x_ref[...] + pe_ref[...]


def build_positional_encoding_forward(batch: int = BATCH,
                                      seq: int = SEQ,
                                      d_model: int = D_MODEL,
                                      max_len: int = MAX_LEN,
                                      dtype=jnp.float32):
    """Init-time setup (mirrors the module's __init__): builds the PE buffer,
    pre-slices/pre-broadcasts it to the slab layout, and returns a jitted
    forward(x) for x of shape (batch, seq, d_model)."""
    assert seq <= max_len, "sequence length must not exceed the PE table length"

    pe = make_pe_table(max_len, d_model)                      # (max_len, d_model), f32

    total = batch * seq * d_model
    # Lane-dense slab: prefer (total // 128, 128); fall back to (batch, seq*d_model).
    if total % LANES == 0:
        slab = (total // LANES, LANES)                        # (4, 128) for the default config
    else:
        slab = (batch, seq * d_model)

    # Pre-broadcast the sliced PE to x's full slab shape (done once, at init).
    pe_slab = (
        jnp.broadcast_to(pe[None, :seq, :], (batch, seq, d_model))
        .astype(dtype)
        .reshape(slab)
    )

    itemsize = jnp.dtype(dtype).itemsize
    kernel_call = pl.pallas_call(
        pe_add_kernel,
        out_shape=jax.ShapeDtypeStruct(slab, dtype),
        # Gridless: whole operands resident in VMEM, no pipeline machinery.
        in_specs=[
            pl.BlockSpec(memory_space=pltpu.MemorySpace.VMEM),
            pl.BlockSpec(memory_space=pltpu.MemorySpace.VMEM),
        ],
        out_specs=pl.BlockSpec(memory_space=pltpu.MemorySpace.VMEM),
        # Output reuses x's slab buffer (x is dead after the add).
        input_output_aliases={0: 0},
        cost_estimate=pl.CostEstimate(
            flops=total, transcendentals=0, bytes_accessed=3 * total * itemsize
        ),
    )

    @jax.jit
    def forward(x: jnp.ndarray) -> jnp.ndarray:
        assert x.shape == (batch, seq, d_model)
        x_slab = x.astype(dtype).reshape(slab)                # free row-major view under jit
        out = kernel_call(x_slab, pe_slab)
        return out.reshape(batch, seq, d_model)

    return forward


if __name__ == "__main__":
    key = jax.random.PRNGKey(0)
    x = jax.random.normal(key, (BATCH, SEQ, D_MODEL), dtype=jnp.float32)

    forward = build_positional_encoding_forward()
    out = forward(x)
    out = jax.block_until_ready(out)

    # Correctness check against the pure-JAX reference of the module's forward.
    pe = make_pe_table(MAX_LEN, D_MODEL)
    ref = x + pe[None, :SEQ, :]
    assert out.shape == (BATCH, SEQ, D_MODEL)
    assert jnp.allclose(out, ref, atol=1e-6, rtol=1e-6)

    print("KERNEL_OK")
</pallas_src>

<mosaic_0001>
module attributes {stable_mosaic.version = 11 : i64} {
  func.func @pe_add_kernel(%arg0: memref<4x128xf32, #tpu.memory_space<vmem>>, %arg1: memref<4x128xf32, #tpu.memory_space<vmem>>, %arg2: memref<4x128xf32, #tpu.memory_space<vmem>>) attributes {dimension_semantics = [], scalar_prefetch = 0 : i64, scratch_operands = 0 : i64, tpu.core_type = #tpu.core_type<tc>} {
    %c0 = arith.constant 0 : index
    %c0_0 = arith.constant 0 : index
    %0 = vector.load %arg0[%c0, %c0_0] : memref<4x128xf32, #tpu.memory_space<vmem>>, vector<4x128xf32>
    %c0_1 = arith.constant 0 : index
    %c0_2 = arith.constant 0 : index
    %1 = vector.load %arg1[%c0_1, %c0_2] : memref<4x128xf32, #tpu.memory_space<vmem>>, vector<4x128xf32>
    %2 = arith.addf %0, %1 : vector<4x128xf32>
    %c0_3 = arith.constant 0 : index
    %c0_4 = arith.constant 0 : index
    %3 = vector.load %arg2[%c0_3, %c0_4] : memref<4x128xf32, #tpu.memory_space<vmem>>, vector<4x128xf32>
    tpu.vector_store %arg2[%c0_3, %c0_4], %2 {strides = array<i32>} : memref<4x128xf32, #tpu.memory_space<vmem>>, vector<4x128xf32>,
    return
  }
}

</mosaic_0001>

<llo_original>
// kernel: forward.1
$region0: #{forward.1}
  #allocation0 [shape = 'u32[]', space=smem, size = 0x4, offset = 0x4, fixed_abs, tag = 'smem constant byte address 0x4 - core index']
  #allocation1 [shape = 'u32[144,128]{1,0:T(1,128)}', space=vmem, size = 0x12000, scoped, tag = 'internal scratch']
  %s0 = inlined_call_operand.vmem [shape: f32[4,128], index: 0, kind: input, shape index: {}, may-alias: {0,2}]
  %s1 = inlined_call_operand.vmem [shape: f32[4,128], index: 1, kind: input, shape index: {}]
  %s2 = inlined_call_operand.vmem [shape: f32[4,128], index: 2, kind: output, shape index: {}, may-alias: {0,2}]
  %s3 = sld [smem:[#allocation0]]
  $region18: #{forward.1} parent=0
    _
  %s5 = ssub.s32 1, %s3
  %s6 = scalar_select 0, %s5, %s3
  // Predicated region
  $region2: #{forward.1} parent=0 // pred_check
    _
  $region3: #{forward.1} parent=0 // pred_check_branch
    %8 = sbr.rel (0) target = $region5
  $region4: #{forward.1} parent=0 // pred_region
    _
  $region5: #{forward.1} parent=0 // pred_fallthru
    _
  // Predicated region
  $region6: #{forward.1} parent=0 // pred_check
    _
  $region7: #{forward.1} parent=0 // pred_check_branch
    %10 = sbr.rel (0) target = $region9
  $region8: #{forward.1} parent=0 // pred_region
    _
  $region9: #{forward.1} parent=0 // pred_fallthru
    _
  %v11 = vld [vmem:[%s0] sm:$0xf]
  %v12 = vld [vmem:[%s1] sm:$0xf]
  %v13 = vadd.f32 %v11, %v12
  %14 = vst [vmem:[%s2] sm:$0xf] %v13
  // Predicated region
  $region10: #{forward.1} parent=0 // pred_check
    _
  $region11: #{forward.1} parent=0 // pred_check_branch
    %16 = sbr.rel (0) target = $region13
  $region12: #{forward.1} parent=0 // pred_region
    _
  $region13: #{forward.1} parent=0 // pred_fallthru
    _
  // Predicated region
  $region14: #{forward.1} parent=0 // pred_check
    _
  $region15: #{forward.1} parent=0 // pred_check_branch
    %18 = sbr.rel (0) target = $region17
  $region16: #{forward.1} parent=0 // pred_region
    _
  $region17: #{forward.1} parent=0 // pred_fallthru
    _

</llo_original>
